<compile_context>
chip_gen: v6e
topology: v6e:2x2x1
jax: 0.10.0
libtpu: 0.0.40
codegen_flags: <defaults>
</compile_context>

<pallas_src>
import jax
import jax.numpy as jnp
from jax import lax
from jax.experimental import pallas as pl
from jax.experimental.pallas import tpu as pltpu


def adj_learner_kernel(q_ref, v_ref, v1_ref, g1_ref, v2_ref, g2_ref,
                       out_ref, h_scratch):
    # q_ref:  (Lq, D) f32   questions, one batch element (leading dim squeezed)
    # v_ref:  (Lv, D) f32   videos, one batch element
    # v1_ref: (H, D)  f32   raw weight_norm direction of edge_layer_1
    # g1_ref: (H, 1)  f32   raw weight_norm magnitude of edge_layer_1
    # v2_ref: (H, H)  f32   raw weight_norm direction of edge_layer_2
    # g2_ref: (H, 1)  f32   raw weight_norm magnitude of edge_layer_2
    # out_ref:(L, L)  f32   adjacency matrix for this batch element
    # h_scratch: (L, H) f32 relu(layer1) assembled in place (q rows then v rows)
    Lq, _ = q_ref.shape

    # ---- weight norm, fused into the kernel (dim=0: per-output-row norm) ----
    v1 = v1_ref[...]                                              # (H, D)
    inv_n1 = lax.rsqrt(jnp.sum(v1 * v1, axis=1, keepdims=True))   # (H, 1), EUP
    w1 = (g1_ref[...] * inv_n1 * v1).astype(jnp.bfloat16)         # (H, D) bf16

    v2 = v2_ref[...]                                              # (H, H)
    inv_n2 = lax.rsqrt(jnp.sum(v2 * v2, axis=1, keepdims=True))   # (H, 1)
    w2 = (g2_ref[...] * inv_n2 * v2).astype(jnp.bfloat16)         # (H, H) bf16

    # Contract the trailing feature dim of BOTH operands (x @ w^T on the MXU,
    # no explicit transpose / relayout of the weight).
    dn_t = (((1,), (1,)), ((), ()))

    # ---- layer 1: per-slab matmul, relu'd result stored straight into its
    #      interleaved row range of h_scratch (replaces the concat copy pass).
    hq = lax.dot_general(q_ref[...].astype(jnp.bfloat16), w1, dn_t,
                         preferred_element_type=jnp.float32)      # (Lq, H)
    h_scratch[:Lq, :] = jnp.maximum(hq, 0.0)
    hv = lax.dot_general(v_ref[...].astype(jnp.bfloat16), w1, dn_t,
                         preferred_element_type=jnp.float32)      # (Lv, H)
    h_scratch[Lq:, :] = jnp.maximum(hv, 0.0)

    # ---- layer 2 on the assembled (L, H) block ----
    h2 = lax.dot_general(h_scratch[...].astype(jnp.bfloat16), w2, dn_t,
                         preferred_element_type=jnp.float32)      # (L, H)
    h2 = jnp.maximum(h2, 0.0)                                     # f32

    # ---- adjacency: one Gram matmul, f32 operands for fidelity ----
    out_ref[...] = lax.dot_general(h2, h2, dn_t,
                                   preferred_element_type=jnp.float32)


def adj_learner_forward(questions, videos, params):
    """questions: (B, Lq, D), videos: (B, Lv, D) -> (B, Lq+Lv, Lq+Lv) f32."""
    B, Lq, D = questions.shape
    _, Lv, _ = videos.shape
    L = Lq + Lv
    H = params["v1"].shape[0]

    flops = B * (2 * L * D * H + 2 * L * H * H + 2 * L * L * H)
    bytes_accessed = (questions.size * 4 + videos.size * 4
                      + (params["v1"].size + params["g1"].size
                         + params["v2"].size + params["g2"].size) * 4
                      + B * L * L * 4)

    return pl.pallas_call(
        adj_learner_kernel,
        out_shape=jax.ShapeDtypeStruct((B, L, L), jnp.float32),
        grid_spec=pltpu.PrefetchScalarGridSpec(
            num_scalar_prefetch=0,
            grid=(B,),  # one independent batch element per grid step
            in_specs=[
                pl.BlockSpec((None, Lq, D), lambda b: (b, 0, 0)),
                pl.BlockSpec((None, Lv, D), lambda b: (b, 0, 0)),
                pl.BlockSpec((H, D), lambda b: (0, 0)),   # weights resident
                pl.BlockSpec((H, 1), lambda b: (0, 0)),
                pl.BlockSpec((H, H), lambda b: (0, 0)),
                pl.BlockSpec((H, 1), lambda b: (0, 0)),
            ],
            out_specs=pl.BlockSpec((None, L, L), lambda b: (b, 0, 0)),
            scratch_shapes=[pltpu.VMEM((L, H), jnp.float32)],
        ),
        compiler_params=pltpu.CompilerParams(
            dimension_semantics=("parallel",)),  # v7x: split batch across TCs
        cost_estimate=pl.CostEstimate(
            flops=flops, transcendentals=2 * H,
            bytes_accessed=bytes_accessed),
    )(questions, videos, params["v1"], params["g1"], params["v2"], params["g2"])


def weight_norm(v, g):
    # PyTorch nn.utils.weight_norm default (dim=0) on Linear weight (out, in):
    # w[o, :] = g[o] * v[o, :] / ||v[o, :]||_2     (g stored as (out, 1))
    norm = jnp.sqrt(jnp.sum(v * v, axis=1, keepdims=True))
    return g * v / norm


def init_params(key, in_feature_dim, hidden_size):
    # Deterministic synthetic init (mirrors nn.Linear kaiming-uniform scale);
    # g initialized to the per-row norm of v so the initial effective weight
    # equals v, matching weight_norm's initialization behavior.  g kept with
    # PyTorch's (out_features, 1) layout.
    k1, k2 = jax.random.split(key)
    bound1 = 1.0 / jnp.sqrt(in_feature_dim)
    bound2 = 1.0 / jnp.sqrt(hidden_size)
    v1 = jax.random.uniform(k1, (hidden_size, in_feature_dim),
                            minval=-bound1, maxval=bound1, dtype=jnp.float32)
    v2 = jax.random.uniform(k2, (hidden_size, hidden_size),
                            minval=-bound2, maxval=bound2, dtype=jnp.float32)
    g1 = jnp.sqrt(jnp.sum(v1 * v1, axis=1, keepdims=True))
    g2 = jnp.sqrt(jnp.sum(v2 * v2, axis=1, keepdims=True))
    return {"v1": v1, "g1": g1, "v2": v2, "g2": g2}


def reference_forward(questions, videos, params):
    # Pure-JAX f32 reference for correctness check.
    x = jnp.concatenate([questions, videos], axis=1)
    w1 = weight_norm(params["v1"], params["g1"])
    w2 = weight_norm(params["v2"], params["g2"])
    h = jax.nn.relu(jnp.einsum("bld,hd->blh", x, w1))
    h = jax.nn.relu(jnp.einsum("blh,gh->blg", h, w2))
    return jnp.einsum("blh,bmh->blm", h, h)


if __name__ == "__main__":
    key = jax.random.PRNGKey(0)
    kq, kv, kp = jax.random.split(key, 3)

    B = 2            # batch
    Lq, Lv = 8, 8    # question / video sequence lengths -> L = 16
    D = 32           # in_feature_dim
    H = 32           # hidden_size

    questions = jax.random.normal(kq, (B, Lq, D), dtype=jnp.float32)
    videos = jax.random.normal(kv, (B, Lv, D), dtype=jnp.float32)
    params = init_params(kp, D, H)

    adj = adj_learner_forward(questions, videos, params)
    adj = jax.block_until_ready(adj)

    ref = reference_forward(questions, videos, params)
    assert adj.shape == (B, Lq + Lv, Lq + Lv)
    # bf16 MXU operands in the two layer matmuls (f32 accumulation, f32 Gram
    # product) -> slightly relaxed tolerance vs. the pure-f32 reference.
    assert jnp.allclose(adj, ref, atol=2e-2, rtol=2e-2)

    print("KERNEL_OK")
</pallas_src>

<mosaic_0001>
module attributes {stable_mosaic.version = 11 : i64} {
  func.func @adj_learner_kernel(%arg0: i32, %arg1: memref<1x8x32xf32, #tpu.memory_space<vmem>>, %arg2: memref<1x8x32xf32, #tpu.memory_space<vmem>>, %arg3: memref<32x32xf32, #tpu.memory_space<vmem>>, %arg4: memref<32x1xf32, #tpu.memory_space<vmem>>, %arg5: memref<32x32xf32, #tpu.memory_space<vmem>>, %arg6: memref<32x1xf32, #tpu.memory_space<vmem>>, %arg7: memref<1x16x16xf32, #tpu.memory_space<vmem>>, %arg8: memref<16x32xf32, #tpu.memory_space<vmem>>) attributes {dimension_semantics = [#tpu.dimension_semantics<parallel>], iteration_bounds = array<i64: 2>, scalar_prefetch = 0 : i64, scratch_operands = 1 : i64, tpu.core_type = #tpu.core_type<tc>, window_params = [{transform_indices = @transform_0, window_bounds = array<i64: 1, 8, 32>}, {transform_indices = @transform_1, window_bounds = array<i64: 1, 8, 32>}, {pipeline_mode = #tpu.pipeline_mode<synchronous>, transform_indices = @transform_2, window_bounds = array<i64: 32, 32>}, {pipeline_mode = #tpu.pipeline_mode<synchronous>, transform_indices = @transform_3, window_bounds = array<i64: 32, 1>}, {pipeline_mode = #tpu.pipeline_mode<synchronous>, transform_indices = @transform_4, window_bounds = array<i64: 32, 32>}, {pipeline_mode = #tpu.pipeline_mode<synchronous>, transform_indices = @transform_5, window_bounds = array<i64: 32, 1>}, {transform_indices = @transform_6, window_bounds = array<i64: 1, 16, 16>}]} {
    %c0 = arith.constant 0 : index
    %c0_0 = arith.constant 0 : index
    %0 = vector.load %arg3[%c0, %c0_0] : memref<32x32xf32, #tpu.memory_space<vmem>>, vector<32x32xf32>
    %1 = arith.mulf %0, %0 : vector<32x32xf32>
    %cst = arith.constant dense<0.000000e+00> : vector<32xf32>
    %2 = vector.multi_reduction <add>, %1, %cst [1] : vector<32x32xf32> to vector<32xf32>
    %3 = vector.shape_cast %2 : vector<32xf32> to vector<32x1xf32>
    %4 = math.rsqrt %3 : vector<32x1xf32>
    %c0_1 = arith.constant 0 : index
    %c0_2 = arith.constant 0 : index
    %5 = vector.load %arg4[%c0_1, %c0_2] : memref<32x1xf32, #tpu.memory_space<vmem>>, vector<32x1xf32>
    %6 = arith.mulf %5, %4 : vector<32x1xf32>
    %7 = vector.broadcast %6 : vector<32x1xf32> to vector<32x32xf32>
    %8 = arith.mulf %7, %0 : vector<32x32xf32>
    %9 = arith.truncf %8 : vector<32x32xf32> to vector<32x32xbf16>
    %c0_3 = arith.constant 0 : index
    %c0_4 = arith.constant 0 : index
    %10 = vector.load %arg5[%c0_3, %c0_4] : memref<32x32xf32, #tpu.memory_space<vmem>>, vector<32x32xf32>
    %11 = arith.mulf %10, %10 : vector<32x32xf32>
    %cst_5 = arith.constant dense<0.000000e+00> : vector<32xf32>
    %12 = vector.multi_reduction <add>, %11, %cst_5 [1] : vector<32x32xf32> to vector<32xf32>
    %13 = vector.shape_cast %12 : vector<32xf32> to vector<32x1xf32>
    %14 = math.rsqrt %13 : vector<32x1xf32>
    %c0_6 = arith.constant 0 : index
    %c0_7 = arith.constant 0 : index
    %15 = vector.load %arg6[%c0_6, %c0_7] : memref<32x1xf32, #tpu.memory_space<vmem>>, vector<32x1xf32>
    %16 = arith.mulf %15, %14 : vector<32x1xf32>
    %17 = vector.broadcast %16 : vector<32x1xf32> to vector<32x32xf32>
    %18 = arith.mulf %17, %10 : vector<32x32xf32>
    %19 = arith.truncf %18 : vector<32x32xf32> to vector<32x32xbf16>
    %c0_8 = arith.constant 0 : index
    %c0_9 = arith.constant 0 : index
    %c0_10 = arith.constant 0 : index
    %20 = vector.load %arg1[%c0_8, %c0_9, %c0_10] : memref<1x8x32xf32, #tpu.memory_space<vmem>>, vector<1x8x32xf32>
    %21 = vector.shape_cast %20 : vector<1x8x32xf32> to vector<8x32xf32>
    %22 = arith.truncf %21 : vector<8x32xf32> to vector<8x32xbf16>
    %cst_11 = arith.constant dense<0.000000e+00> : vector<8x32xf32>
    %23 = tpu.matmul %22, %9, %cst_11 {dimension_numbers = #tpu.dot_dimension_numbers<[1], [1], [0], [0], [0, 0, 1, 0], [], []>} : vector<8x32xbf16>, vector<32x32xbf16>, vector<8x32xf32> -> vector<8x32xf32>
    %cst_12 = arith.constant 0.000000e+00 : f32
    %24 = vector.broadcast %cst_12 : f32 to vector<8x32xf32>
    %25 = arith.maximumf %23, %24 : vector<8x32xf32>
    %c0_13 = arith.constant 0 : index
    %c0_14 = arith.constant 0 : index
    %26 = vector.load %arg8[%c0_13, %c0_14] : memref<16x32xf32, #tpu.memory_space<vmem>>, vector<8x32xf32>
    tpu.vector_store %arg8[%c0_13, %c0_14], %25 {strides = array<i32>} : memref<16x32xf32, #tpu.memory_space<vmem>>, vector<8x32xf32>,
    %c0_15 = arith.constant 0 : index
    %c0_16 = arith.constant 0 : index
    %c0_17 = arith.constant 0 : index
    %27 = vector.load %arg2[%c0_15, %c0_16, %c0_17] : memref<1x8x32xf32, #tpu.memory_space<vmem>>, vector<1x8x32xf32>
    %28 = vector.shape_cast %27 : vector<1x8x32xf32> to vector<8x32xf32>
    %29 = arith.truncf %28 : vector<8x32xf32> to vector<8x32xbf16>
    %cst_18 = arith.constant dense<0.000000e+00> : vector<8x32xf32>
    %30 = tpu.matmul %29, %9, %cst_18 {dimension_numbers = #tpu.dot_dimension_numbers<[1], [1], [0], [0], [0, 0, 1, 0], [], []>} : vector<8x32xbf16>, vector<32x32xbf16>, vector<8x32xf32> -> vector<8x32xf32>
    %cst_19 = arith.constant 0.000000e+00 : f32
    %31 = vector.broadcast %cst_19 : f32 to vector<8x32xf32>
    %32 = arith.maximumf %30, %31 : vector<8x32xf32>
    %c8 = arith.constant 8 : index
    %c0_20 = arith.constant 0 : index
    %33 = vector.load %arg8[%c8, %c0_20] : memref<16x32xf32, #tpu.memory_space<vmem>>, vector<8x32xf32>
    tpu.vector_store %arg8[%c8, %c0_20], %32 {strides = array<i32>} : memref<16x32xf32, #tpu.memory_space<vmem>>, vector<8x32xf32>,
    %c0_21 = arith.constant 0 : index
    %c0_22 = arith.constant 0 : index
    %34 = vector.load %arg8[%c0_21, %c0_22] : memref<16x32xf32, #tpu.memory_space<vmem>>, vector<16x32xf32>
    %35 = arith.truncf %34 : vector<16x32xf32> to vector<16x32xbf16>
    %cst_23 = arith.constant dense<0.000000e+00> : vector<16x32xf32>
    %36 = tpu.matmul %35, %19, %cst_23 {dimension_numbers = #tpu.dot_dimension_numbers<[1], [1], [0], [0], [0, 0, 1, 0], [], []>} : vector<16x32xbf16>, vector<32x32xbf16>, vector<16x32xf32> -> vector<16x32xf32>
    %cst_24 = arith.constant 0.000000e+00 : f32
    %37 = vector.broadcast %cst_24 : f32 to vector<16x32xf32>
    %38 = arith.maximumf %36, %37 : vector<16x32xf32>
    %cst_25 = arith.constant dense<0.000000e+00> : vector<16x16xf32>
    %39 = tpu.matmul %38, %38, %cst_25 {dimension_numbers = #tpu.dot_dimension_numbers<[1], [1], [0], [0], [0, 0, 1, 0], [], []>} : vector<16x32xf32>, vector<16x32xf32>, vector<16x16xf32> -> vector<16x16xf32>
    %c0_26 = arith.constant 0 : index
    %c0_27 = arith.constant 0 : index
    %c0_28 = arith.constant 0 : index
    %40 = vector.load %arg7[%c0_26, %c0_27, %c0_28] : memref<1x16x16xf32, #tpu.memory_space<vmem>>, vector<1x16x16xf32>
    %41 = vector.shape_cast %40 : vector<1x16x16xf32> to vector<16x16xf32>
    %42 = vector.shape_cast %39 : vector<16x16xf32> to vector<1x16x16xf32>
    tpu.vector_store %arg7[%c0_26, %c0_27, %c0_28], %42 {strides = array<i32>} : memref<1x16x16xf32, #tpu.memory_space<vmem>>, vector<1x16x16xf32>,
    return
  }
  func.func @transform_0(%arg0: i32) -> (i32, i32, i32) {
    %c0_i32 = arith.constant 0 : i32
    %c0_i32_0 = arith.constant 0 : i32
    %c0_i32_1 = arith.constant 0 : i32
    return %arg0, %c0_i32, %c0_i32_0 : i32, i32, i32
  }
  func.func @transform_1(%arg0: i32) -> (i32, i32, i32) {
    %c0_i32 = arith.constant 0 : i32
    %c0_i32_0 = arith.constant 0 : i32
    %c0_i32_1 = arith.constant 0 : i32
    return %arg0, %c0_i32, %c0_i32_0 : i32, i32, i32
  }
  func.func @transform_2(%arg0: i32) -> (i32, i32) {
    %c0_i32 = arith.constant 0 : i32
    %c0_i32_0 = arith.constant 0 : i32
    %c0_i32_1 = arith.constant 0 : i32
    return %c0_i32, %c0_i32_0 : i32, i32
  }
  func.func @transform_3(%arg0: i32) -> (i32, i32) {
    %c0_i32 = arith.constant 0 : i32
    %c0_i32_0 = arith.constant 0 : i32
    %c0_i32_1 = arith.constant 0 : i32
    return %c0_i32, %c0_i32_0 : i32, i32
  }
  func.func @transform_4(%arg0: i32) -> (i32, i32) {
    %c0_i32 = arith.constant 0 : i32
    %c0_i32_0 = arith.constant 0 : i32
    %c0_i32_1 = arith.constant 0 : i32
    return %c0_i32, %c0_i32_0 : i32, i32
  }
  func.func @transform_5(%arg0: i32) -> (i32, i32) {
    %c0_i32 = arith.constant 0 : i32
    %c0_i32_0 = arith.constant 0 : i32
    %c0_i32_1 = arith.constant 0 : i32
    return %c0_i32, %c0_i32_0 : i32, i32
  }
  func.func @transform_6(%arg0: i32) -> (i32, i32, i32) {
    %c0_i32 = arith.constant 0 : i32
    %c0_i32_0 = arith.constant 0 : i32
    %c0_i32_1 = arith.constant 0 : i32
    return %arg0, %c0_i32, %c0_i32_0 : i32, i32, i32
  }
}

</mosaic_0001>

<llo_original>
// kernel: tpu_custom_call.1
$region0: #{tpu_custom_call.1}
  #allocation0 [shape = 'u32[]', space=smem, size = 0x4, offset = 0x4, fixed_abs, tag = 'smem constant byte address 0x4 - core index']
  #allocation1 [shape = 'u32[144,128]{1,0:T(1,128)}', space=vmem, size = 0x12000, scoped, tag = 'internal scratch']
  #allocation2 [shape = 'f32[16,32]{1,0:T(8,128)}', space=vmem, size = 0x2000, scoped, tag = 'scratch operand']
  %s0 = inlined_call_operand.hbm [shape: f32[2,8,32], index: 0, kind: input, shape index: {}]
  %s1 = inlined_call_operand.hbm [shape: f32[2,8,32], index: 1, kind: input, shape index: {}]
  %s2 = inlined_call_operand.vmem [shape: f32[32,32], index: 2, kind: input, shape index: {}]
  %s3 = inlined_call_operand.vmem [shape: f32[32,1], index: 3, kind: input, shape index: {}]
  %s4 = inlined_call_operand.vmem [shape: f32[32,32], index: 4, kind: input, shape index: {}]
  %s5 = inlined_call_operand.vmem [shape: f32[32,1], index: 5, kind: input, shape index: {}]
  %s6 = inlined_call_operand.hbm [shape: f32[2,16,16], index: 6, kind: output, shape index: {}]
  %s7 = sld [smem:[#allocation0]]
  $region65: #{tpu_custom_call.1} parent=0
    _
  %s9 = ssub.s32 1, %s7
  %s10 = scalar_select 0, %s9, %s7
  $region1: #{tpu_custom_call.1} parent=0
    #allocation3 [shape = 'u8[8192]{0}', space=vmem, size = 0x2000, scoped, tag = 'input window, operand 0']
    #allocation4 [shape = 's32[2]{0}', space=sflag, size = 0x8, scoped, tag = 'scoped memory for tpu_custom_call.1']
    #allocation5 [shape = 's32[2]{0}', space=sflag, size = 0x8, scoped, tag = 'scoped memory for tpu_custom_call.1']
    #allocation6 [shape = 'u8[8192]{0}', space=vmem, size = 0x2000, scoped, tag = 'input window, operand 1']
    #allocation7 [shape = 's32[2]{0}', space=sflag, size = 0x8, scoped, tag = 'scoped memory for tpu_custom_call.1']
    #allocation8 [shape = 'u8[16384]{0}', space=vmem, size = 0x4000, scoped, tag = 'output window, operand 0']
    %11 = vsyncpa [#allocation4], 0
    %s12 = scalar_lea.sflag [#allocation4], 1
    %13 = vsyncpa %s12, 0
    %14 = vsyncpa [#allocation7], 0
    %s15 = scalar_lea.sflag [#allocation7], 1
    %16 = vsyncpa %s15, 0
    %17 = vsyncpa [#allocation5], 0
    %s18 = scalar_lea.sflag [#allocation5], 1
    %19 = vsyncpa %s18, 0
    loop: start=0, step=1, limit=4
    $region2: #{tpu_custom_call.1} parent=1 // loop_pre_header
      _
    $region3: #{tpu_custom_call.1} parent=1 // loop_header
      %s21 = sphi 0, %s25
      %p22 = scmp.ge.s32.totalorder %s21, 4
      %s31 = sphi 0, %s33
      %s34 = sphi 0, %s31
      %s35 = sphi 0, %s34
      %s51 = sphi 0, %s35
      %s57 = sphi 0, %s59
      %s60 = sphi 0, %s57
      %s61 = sphi 0, %s60
      %s77 = sphi 0, %s61
      %s81 = sphi 0, %s81
      %s83 = sphi 0, %s81
      %s84 = sphi 0, %s83
      %s98 = sphi 0, %s84
      %s102 = sphi 0, %s102
      %s104 = sphi 0, %s102
      %s105 = sphi 0, %s104
      %s119 = sphi 0, %s105
      %s123 = sphi 0, %s123
      %s125 = sphi 0, %s123
      %s126 = sphi 0, %s125
      %s140 = sphi 0, %s126
      %s144 = sphi 0, %s144
      %s146 = sphi 0, %s144
      %s147 = sphi 0, %s146
      %s161 = sphi 0, %s147
      %s167 = sphi 0, %s169
      %s170 = sphi 0, %s167
      %s171 = sphi 0, %s170
      %s187 = sphi 0, %s171
    $region4: #{tpu_custom_call.1} parent=1 // loop_header_branch
      %24 = sbr.rel (%p22) target = $region8
    $region5: #{tpu_custom_call.1} parent=1 // loop_body
      %s26 = ssub.s32 %s21, 1
      %s27 = ssub.s32 %s21, 2
      %s28 = sadd.s32 %s21, 1
      %s29 = ssub.s32 %s21, %s28
      %p30 = scmp.eq.s32.totalorder %s29, 0
      %s32 = sadd.s32 %s31, 1
      %s33 = scalar_select %p30, %s31, %s32
      %p36 = pneg %p30
      %p37 = scmp.eq.s32.totalorder %s21, 1
      %p38 = por %p36, %p37
      %p39 = scmp.ne.s32.totalorder %s31, %s34
      %p40 = scmp.eq.s32.totalorder %s21, 0
      %p41 = por %p39, %p40
      %p42 = scmp.ne.s32.totalorder %s31, %s34
      %p43 = scmp.eq.s32.totalorder %s26, 1
      %p44 = por %p42, %p43
      %p45 = scmp.ne.s32.totalorder %s34, %s35
      %p46 = scmp.eq.s32.totalorder %s26, 0
      %p47 = por %p45, %p46
      %p48 = scmp.ne.s32.totalorder %s34, %s35
      %p49 = scmp.eq.s32.totalorder %s27, 1
      %p50 = por %p48, %p49
      %p52 = scmp.ne.s32.totalorder %s35, %s51
      %p53 = scmp.eq.s32.totalorder %s27, 0
      %p54 = por %p52, %p53
      %s55 = ssub.s32 %s21, %s28
      %p56 = scmp.eq.s32.totalorder %s55, 0
      %s58 = sadd.s32 %s57, 1
      %s59 = scalar_select %p56, %s57, %s58
      %p62 = pneg %p56
      %p63 = scmp.eq.s32.totalorder %s21, 1
      %p64 = por %p62, %p63
      %p65 = scmp.ne.s32.totalorder %s57, %s60
      %p66 = scmp.eq.s32.totalorder %s21, 0
      %p67 = por %p65, %p66
      %p68 = scmp.ne.s32.totalorder %s57, %s60
      %p69 = scmp.eq.s32.totalorder %s26, 1
      %p70 = por %p68, %p69
      %p71 = scmp.ne.s32.totalorder %s60, %s61
      %p72 = scmp.eq.s32.totalorder %s26, 0
      %p73 = por %p71, %p72
      %p74 = scmp.ne.s32.totalorder %s60, %s61
      %p75 = scmp.eq.s32.totalorder %s27, 1
      %p76 = por %p74, %p75
      %p78 = scmp.ne.s32.totalorder %s61, %s77
      %p79 = scmp.eq.s32.totalorder %s27, 0
      %p80 = por %p78, %p79
      %s82 = sadd.s32 %s81, 1
      %p85 = scmp.eq.s32.totalorder %s21, 1
      %p86 = scmp.ne.s32.totalorder %s81, %s83
      %p87 = scmp.eq.s32.totalorder %s21, 0
      %p88 = por %p86, %p87
      %p89 = scmp.ne.s32.totalorder %s81, %s83
      %p90 = scmp.eq.s32.totalorder %s26, 1
      %p91 = por %p89, %p90
      %p92 = scmp.ne.s32.totalorder %s83, %s84
      %p93 = scmp.eq.s32.totalorder %s26, 0
      %p94 = por %p92, %p93
      %p95 = scmp.ne.s32.totalorder %s83, %s84
      %p96 = scmp.eq.s32.totalorder %s27, 1
      %p97 = por %p95, %p96
      %p99 = scmp.ne.s32.totalorder %s84, %s98
      %p100 = scmp.eq.s32.totalorder %s27, 0
      %p101 = por %p99, %p100
      %s103 = sadd.s32 %s102, 1
      %p106 = scmp.eq.s32.totalorder %s21, 1
      %p107 = scmp.ne.s32.totalorder %s102, %s104
      %p108 = scmp.eq.s32.totalorder %s21, 0
      %p109 = por %p107, %p108
      %p110 = scmp.ne.s32.totalorder %s102, %s104
      %p111 = scmp.eq.s32.totalorder %s26, 1
      %p112 = por %p110, %p111
      %p113 = scmp.ne.s32.totalorder %s104, %s105
      %p114 = scmp.eq.s32.totalorder %s26, 0
      %p115 = por %p113, %p114
      %p116 = scmp.ne.s32.totalorder %s104, %s105
      %p117 = scmp.eq.s32.totalorder %s27, 1
      %p118 = por %p116, %p117
      %p120 = scmp.ne.s32.totalorder %s105, %s119
      %p121 = scmp.eq.s32.totalorder %s27, 0
      %p122 = por %p120, %p121
      %s124 = sadd.s32 %s123, 1
      %p127 = scmp.eq.s32.totalorder %s21, 1
      %p128 = scmp.ne.s32.totalorder %s123, %s125
      %p129 = scmp.eq.s32.totalorder %s21, 0
      %p130 = por %p128, %p129
      %p131 = scmp.ne.s32.totalorder %s123, %s125
      %p132 = scmp.eq.s32.totalorder %s26, 1
      %p133 = por %p131, %p132
      %p134 = scmp.ne.s32.totalorder %s125, %s126
      %p135 = scmp.eq.s32.totalorder %s26, 0
      %p136 = por %p134, %p135
      %p137 = scmp.ne.s32.totalorder %s125, %s126
      %p138 = scmp.eq.s32.totalorder %s27, 1
      %p139 = por %p137, %p138
      %p141 = scmp.ne.s32.totalorder %s126, %s140
      %p142 = scmp.eq.s32.totalorder %s27, 0
      %p143 = por %p141, %p142
      %s145 = sadd.s32 %s144, 1
      %p148 = scmp.eq.s32.totalorder %s21, 1
      %p149 = scmp.ne.s32.totalorder %s144, %s146
      %p150 = scmp.eq.s32.totalorder %s21, 0
      %p151 = por %p149, %p150
      %p152 = scmp.ne.s32.totalorder %s144, %s146
      %p153 = scmp.eq.s32.totalorder %s26, 1
      %p154 = por %p152, %p153
      %p155 = scmp.ne.s32.totalorder %s146, %s147
      %p156 = scmp.eq.s32.totalorder %s26, 0
      %p157 = por %p155, %p156
      %p158 = scmp.ne.s32.totalorder %s146, %s147
      %p159 = scmp.eq.s32.totalorder %s27, 1
      %p160 = por %p158, %p159
      %p162 = scmp.ne.s32.totalorder %s147, %s161
      %p163 = scmp.eq.s32.totalorder %s27, 0
      %p164 = por %p162, %p163
      %s165 = ssub.s32 %s21, %s28
      %p166 = scmp.eq.s32.totalorder %s165, 0
      %s168 = sadd.s32 %s167, 1
      %s169 = scalar_select %p166, %s167, %s168
      %p172 = pneg %p166
      %p173 = scmp.eq.s32.totalorder %s21, 1
      %p174 = por %p172, %p173
      %p175 = scmp.ne.s32.totalorder %s167, %s170
      %p176 = scmp.eq.s32.totalorder %s21, 0
      %p177 = por %p175, %p176
      %p178 = scmp.ne.s32.totalorder %s167, %s170
      %p179 = scmp.eq.s32.totalorder %s26, 1
      %p180 = por %p178, %p179
      %p181 = scmp.ne.s32.totalorder %s170, %s171
      %p182 = scmp.eq.s32.totalorder %s26, 0
      %p183 = por %p181, %p182
      %p184 = scmp.ne.s32.totalorder %s170, %s171
      %p185 = scmp.eq.s32.totalorder %s27, 1
      %p186 = por %p184, %p185
      %p188 = scmp.ne.s32.totalorder %s171, %s187
      %p189 = scmp.eq.s32.totalorder %s27, 0
      %p190 = por %p188, %p189
      %p191 = scmp.le.s32.totalorder 1, %s21
      %p192 = scmp.lt.s32.totalorder %s21, 3
      %p193 = pnand %p191, %p192
      %p194 = pneg %p193
      // Predicated region
      $region9: #{tpu_custom_call.1} parent=5 // pred_check
        _
      $region10: #{tpu_custom_call.1} parent=5 // pred_check_branch
        %196 = sbr.rel (%p193) target = $region12
      $region11: #{tpu_custom_call.1} parent=5 // pred_region
        %s197 = ssub.s32 %s21, 1
        // Predicated region
        $region13: #{tpu_custom_call.1} parent=11 // pred_check
          %p198 = pneg %p94
        $region14: #{tpu_custom_call.1} parent=11 // pred_check_branch
          %200 = sbr.rel (%p198) target = $region16
        $region15: #{tpu_custom_call.1} parent=11 // pred_region
          _
        $region16: #{tpu_custom_call.1} parent=11 // pred_fallthru
          _
        // Predicated region
        $region17: #{tpu_custom_call.1} parent=11 // pred_check
          %p201 = pneg %p115
        $region18: #{tpu_custom_call.1} parent=11 // pred_check_branch
          %203 = sbr.rel (%p201) target = $region20
        $region19: #{tpu_custom_call.1} parent=11 // pred_region
          _
        $region20: #{tpu_custom_call.1} parent=11 // pred_fallthru
          _
        // Predicated region
        $region21: #{tpu_custom_call.1} parent=11 // pred_check
          %p204 = pneg %p136
        $region22: #{tpu_custom_call.1} parent=11 // pred_check_branch
          %206 = sbr.rel (%p204) target = $region24
        $region23: #{tpu_custom_call.1} parent=11 // pred_region
          _
        $region24: #{tpu_custom_call.1} parent=11 // pred_fallthru
          _
        // Predicated region
        $region25: #{tpu_custom_call.1} parent=11 // pred_check
          %p207 = pneg %p157
        $region26: #{tpu_custom_call.1} parent=11 // pred_check_branch
          %209 = sbr.rel (%p207) target = $region28
        $region27: #{tpu_custom_call.1} parent=11 // pred_region
          _
        $region28: #{tpu_custom_call.1} parent=11 // pred_fallthru
          _
      $region12: #{tpu_custom_call.1} parent=5 // pred_fallthru
        _
      %p210 = scmp.lt.s32.totalorder %s21, 2
      // Predicated region
      $region29: #{tpu_custom_call.1} parent=5 // pred_check
        %p211 = pneg %p210
      $region30: #{tpu_custom_call.1} parent=5 // pred_check_branch
        %213 = sbr.rel (%p211) target = $region32
      $region31: #{tpu_custom_call.1} parent=5 // pred_region
        // Predicated region
        $region33: #{tpu_custom_call.1} parent=31 // pred_check
          %p214 = pneg %p41
        $region34: #{tpu_custom_call.1} parent=31 // pred_check_branch
          %216 = sbr.rel (%p214) target = $region36
        $region35: #{tpu_custom_call.1} parent=31 // pred_region
          %s217 = sand.u32 %s31, 1
          %s218 = scalar_lea.sflag [#allocation4], %s217
          %s219 = sand.u32 %s31, 1
          %s220 = smul.addr %s219, 8
          %s221 = scalar_lea.vmem [#allocation3], %s220
          %s223 = ssub.s32 128, 128
          %224 = vsyncadd %s218, %s223
          %s225 = smul.addr %s21, 128
          %s226 = scalar_lea.hbm %s0, %s225
          %s228 = sshll.u32 %s221, 4
          %s229 = int_to_ptr.vmem [resolvable:$true] %s228
          %231 = dma.hbm_to_vmem [thread:$0]  %s226, 128, %s229, %s218
        $region36: #{tpu_custom_call.1} parent=31 // pred_fallthru
          _
        // Predicated region
        $region37: #{tpu_custom_call.1} parent=31 // pred_check
          %p232 = pneg %p67
        $region38: #{tpu_custom_call.1} parent=31 // pred_check_branch
          %234 = sbr.rel (%p232) target = $region40
        $region39: #{tpu_custom_call.1} parent=31 // pred_region
          %s235 = sand.u32 %s57, 1
          %s236 = scalar_lea.sflag [#allocation7], %s235
          %s237 = sand.u32 %s57, 1
          %s238 = smul.addr %s237, 8
          %s239 = scalar_lea.vmem [#allocation6], %s238
          %s241 = ssub.s32 128, 128
          %242 = vsyncadd %s236, %s241
          %s243 = smul.addr %s21, 128
          %s244 = scalar_lea.hbm %s1, %s243
          %s246 = sshll.u32 %s239, 4
          %s247 = int_to_ptr.vmem [resolvable:$true] %s246
          %249 = dma.hbm_to_vmem [thread:$0]  %s244, 128, %s247, %s236
        $region40: #{tpu_custom_call.1} parent=31 // pred_fallthru
          _
      $region32: #{tpu_custom_call.1} parent=5 // pred_fallthru
        _
      %p250 = scmp.le.s32.totalorder 1, %s21
      %p251 = scmp.lt.s32.totalorder %s21, 3
      %p252 = pnand %p250, %p251
      %p253 = pneg %p252
      // Predicated region
      $region41: #{tpu_custom_call.1} parent=5 // pred_check
        _
      $region42: #{tpu_custom_call.1} parent=5 // pred_check_branch
        %255 = sbr.rel (%p252) target = $region44
      $region43: #{tpu_custom_call.1} parent=5 // pred_region
        %s256 = ssub.s32 %s21, 1
        %s257 = sand.u32 %s34, 1
        %s258 = scalar_lea.sflag [#allocation4], %s257
        %s259 = sand.u32 %s34, 1
        %s260 = smul.addr %s259, 8
        %s261 = scalar_lea.vmem [#allocation3], %s260
        // Predicated region
        $region45: #{tpu_custom_call.1} parent=43 // pred_check
          %p262 = pneg %p47
        $region46: #{tpu_custom_call.1} parent=43 // pred_check_branch
          %264 = sbr.rel (%p262) target = $region48
        $region47: #{tpu_custom_call.1} parent=43 // pred_region
          %265 = dma.done %s258, 128
        $region48: #{tpu_custom_call.1} parent=43 // pred_fallthru
          _
        %s266 = sand.u32 %s60, 1
        %s267 = scalar_lea.sflag [#allocation7], %s266
        %s268 = sand.u32 %s60, 1
        %s269 = smul.addr %s268, 8
        %s270 = scalar_lea.vmem [#allocation6], %s269
        // Predicated region
        $region49: #{tpu_custom_call.1} parent=43 // pred_check
          %p271 = pneg %p73
        $region50: #{tpu_custom_call.1} parent=43 // pred_check_branch
          %273 = sbr.rel (%p271) target = $region52
        $region51: #{tpu_custom_call.1} parent=43 // pred_region
          %274 = dma.done %s267, 128
        $region52: #{tpu_custom_call.1} parent=43 // pred_fallthru
          _
        %s275 = sand.u32 %s34, 1
        %s276 = scalar_lea.sflag [#allocation4], %s275
        %s277 = sand.u32 %s34, 1
        %s278 = smul.addr %s277, 8
        %s279 = scalar_lea.vmem [#allocation3], %s278
        %p280 = pneg %p47
        %p281 = pneg %p44
        %s282 = sand.u32 %s60, 1
        %s283 = scalar_lea.sflag [#allocation7], %s282
        %s284 = sand.u32 %s60, 1
        %s285 = smul.addr %s284, 8
        %s286 = scalar_lea.vmem [#allocation6], %s285
        %p287 = pneg %p73
        %p288 = pneg %p70
        %p289 = pneg %p94
        %p290 = pneg %p91
        %p291 = pneg %p115
        %p292 = pneg %p112
        %p293 = pneg %p136
        %p294 = pneg %p133
        %p295 = pneg %p157
        %p296 = pneg %p154
        %p297 = pneg %p183
        %p298 = pneg %p180
        %s299 = sand.u32 %s170, 1
        %s300 = scalar_lea.sflag [#allocation5], %s299
        %s301 = sand.u32 %s170, 1
        %s302 = smul.addr %s301, 16
        %s303 = scalar_lea.vmem [#allocation8], %s302
        %v305 = vld [vmem:[%s2] sm:$0xff]
        %v306 = vld [vmem:[%s2 + $0x8] sm:$0xff]
        %v307 = vld [vmem:[%s2 + $0x10] sm:$0xff]
        %v308 = vld [vmem:[%s2 + $0x18] sm:$0xff]
        %v309 = vmul.f32 %v305, %v305
        %v310 = vmul.f32 %v306, %v306
        %v311 = vmul.f32 %v307, %v307
        %v312 = vmul.f32 %v308, %v308
        %vm313 = vcmask 261120
        %v314 = vsel %vm313, %v309, 0.0
        %315 = vadd.xlane.f32.xlu0 %v314
        %v316 = vpop.xlane.xlu0 %315
        %v317 = vsel %vm313, %v310, 0.0
        %318 = vadd.xlane.f32.xlu0 %v317
        %v319 = vpop.xlane.xlu0 %318
        %v320 = vsel %vm313, %v311, 0.0
        %321 = vadd.xlane.f32.xlu0 %v320
        %v322 = vpop.xlane.xlu0 %321
        %v323 = vsel %vm313, %v312, 0.0
        %324 = vadd.xlane.f32.xlu0 %v323
        %v325 = vpop.xlane.xlu0 %324
        %v326 = vrsqrt.pop %v316
        %v327 = vrsqrt.pop %v319
        %v328 = vrsqrt.pop %v322
        %v329 = vrsqrt.pop %v325
        %v330 = vld [vmem:[%s3] sm:$0xff]
        %v331 = vld [vmem:[%s3 + $0x8] sm:$0xff]
        %v332 = vld [vmem:[%s3 + $0x10] sm:$0xff]
        %v333 = vld [vmem:[%s3 + $0x18] sm:$0xff]
        %v334 = vmul.f32 %v330, %v326
        %v335 = vmul.f32 %v331, %v327
        %v336 = vmul.f32 %v332, %v328
        %v337 = vmul.f32 %v333, %v329
        %339 = vset.pattern.permute.xlu0 0
        %340 = vperm.xlu0 %339, %v334
        %v341 = vpop.permute.xlu0 %340
        %344 = vset.pattern.permute.xlu0 0
        %345 = vperm.xlu0 %344, %v335
        %v346 = vpop.permute.xlu0 %345
        %349 = vset.pattern.permute.xlu0 0
        %350 = vperm.xlu0 %349, %v336
        %v351 = vpop.permute.xlu0 %350
        %354 = vset.pattern.permute.xlu0 0
        %355 = vperm.xlu0 %354, %v337
        %v356 = vpop.permute.xlu0 %355
        %v358 = vmul.f32 %v341, %v305
        %v359 = vmul.f32 %v346, %v306
        %v360 = vmul.f32 %v351, %v307
        %v361 = vmul.f32 %v356, %v308
        %v362 = vpack.c.bf16 %v359, %v358
        %v363 = vpack.c.bf16 %v361, %v360
        %v364 = vld [vmem:[%s4] sm:$0xff]
        %v365 = vld [vmem:[%s4 + $0x8] sm:$0xff]
        %v366 = vld [vmem:[%s4 + $0x10] sm:$0xff]
        %v367 = vld [vmem:[%s4 + $0x18] sm:$0xff]
        %v368 = vmul.f32 %v364, %v364
        %v369 = vmul.f32 %v365, %v365
        %v370 = vmul.f32 %v366, %v366
        %v371 = vmul.f32 %v367, %v367
        %v372 = vsel %vm313, %v368, 0.0
        %373 = vadd.xlane.f32.xlu0 %v372
        %v374 = vpop.xlane.xlu0 %373
        %v375 = vsel %vm313, %v369, 0.0
        %376 = vadd.xlane.f32.xlu0 %v375
        %v377 = vpop.xlane.xlu0 %376
        %v378 = vsel %vm313, %v370, 0.0
        %379 = vadd.xlane.f32.xlu0 %v378
        %v380 = vpop.xlane.xlu0 %379
        %v381 = vsel %vm313, %v371, 0.0
        %382 = vadd.xlane.f32.xlu0 %v381
        %v383 = vpop.xlane.xlu0 %382
        %v384 = vrsqrt.pop %v374
        %v385 = vrsqrt.pop %v377
        %v386 = vrsqrt.pop %v380
        %v387 = vrsqrt.pop %v383
        %v388 = vld [vmem:[%s5] sm:$0xff]
        %v389 = vld [vmem:[%s5 + $0x8] sm:$0xff]
        %v390 = vld [vmem:[%s5 + $0x10] sm:$0xff]
        %v391 = vld [vmem:[%s5 + $0x18] sm:$0xff]
        %v392 = vmul.f32 %v388, %v384
        %v393 = vmul.f32 %v389, %v385
        %v394 = vmul.f32 %v390, %v386
        %v395 = vmul.f32 %v391, %v387
        %397 = vset.pattern.permute.xlu0 0
        %398 = vperm.xlu0 %397, %v392
        %v399 = vpop.permute.xlu0 %398
        %402 = vset.pattern.permute.xlu0 0
        %403 = vperm.xlu0 %402, %v393
        %v404 = vpop.permute.xlu0 %403
        %407 = vset.pattern.permute.xlu0 0
        %408 = vperm.xlu0 %407, %v394
        %v409 = vpop.permute.xlu0 %408
        %412 = vset.pattern.permute.xlu0 0
        %413 = vperm.xlu0 %412, %v395
        %v414 = vpop.permute.xlu0 %413
        %v416 = vmul.f32 %v399, %v364
        %v417 = vmul.f32 %v404, %v365
        %v418 = vmul.f32 %v409, %v366
        %v419 = vmul.f32 %v414, %v367
        %v420 = vpack.c.bf16 %v417, %v416
        %v421 = vpack.c.bf16 %v419, %v418
        %v422 = vld [vmem:[%s261] sm:$0xff]
        %v423 = vpack.c.bf16 %v422, %v422
        %v425 = vsel %vm313, %v423, 0
        %v428 = vsel %vm313, %v362, 0
        %v431 = vsel %vm313, %v363, 0
        %433 = vmatprep.subr.bf16.mxu0 0
        %434 = vmatpush1.bf16.xpose.msra.mxu0 0
        %435 = vmatprep.subr.bf16.mxu0 0
        %436 = vmatpush1.bf16.xpose.msra.mxu0 0
        %437 = vmatprep.subr.bf16.mxu0 0
        %438 = vmatpush1.bf16.xpose.msra.mxu0 0
        %439 = vmatprep.subr.bf16.mxu0 0
        %440 = vmatpush1.bf16.xpose.msra.mxu0 0
        %441 = vmatprep.subr.bf16.mxu0 0
        %442 = vmatpush1.bf16.xpose.msra.mxu0 0
        %443 = vmatprep.subr.bf16.mxu0 0
        %444 = vmatpush1.bf16.xpose.msra.mxu0 0
        %445 = vmatprep.subr.bf16.mxu0 0
        %446 = vmatpush1.bf16.xpose.msra.mxu0 %v431
        %447 = vmatprep.subr.bf16.mxu0 0
        %448 = vmatpush1.bf16.xpose.msra.mxu0 %v428
        %449 = vmatprep.subr.bf16.mxu0 0
        %450 = vmatpush2.bf16.xpose.msra.mxu0 0
        %451 = vmatprep.subr.bf16.mxu0 0
        %452 = vmatpush2.bf16.xpose.msra.mxu0 0
        %453 = vmatprep.subr.bf16.mxu0 0
        %454 = vmatpush2.bf16.xpose.msra.mxu0 0
        %455 = vmatprep.subr.bf16.mxu0 0
        %456 = vmatpush2.bf16.xpose.msra.mxu0 0
        %457 = vmatprep.subr.bf16.mxu0 0
        %458 = vmatpush2.bf16.xpose.msra.mxu0 0
        %459 = vmatprep.subr.bf16.mxu0 0
        %460 = vmatpush2.bf16.xpose.msra.mxu0 0
        %461 = vmatprep.subr.bf16.mxu0 0
        %462 = vmatpush2.bf16.xpose.msra.mxu0 0
        %463 = vmatprep.subr.bf16.mxu0 0
        %464 = vmatpush2.bf16.xpose.msra.mxu0 0
        %465 = vmatprep.mubr.bf16.mxu0 0
        %466 = vmatmul.mubr.bf16.gmra.mxu0 %v425
        %v467 = vpop.f32.mrf.mxu0
        %v468 = vadd.f32 0.0, %v467
        %v469 = vpop.f32.mrf.mxu0
        %v470 = vpop.f32.mrf.mxu0
        %v471 = vpop.f32.mrf.mxu0
        %472 = vdwg.mxu0
        %v473 = vmax.f32 %v468, 0.0
        %474 = vst.msk [vmem:[#allocation2] sm:$0xff] %vm313, %v473
        %v475 = vld [vmem:[%s270] sm:$0xff]
        %v476 = vpack.c.bf16 %v475, %v475
        %v478 = vsel %vm313, %v476, 0
        %480 = vmatprep.subr.bf16.mxu0 0
        %481 = vmatpush1.bf16.xpose.msra.mxu0 0
        %482 = vmatprep.subr.bf16.mxu0 0
        %483 = vmatpush1.bf16.xpose.msra.mxu0 0
        %484 = vmatprep.subr.bf16.mxu0 0
        %485 = vmatpush1.bf16.xpose.msra.mxu0 0
        %486 = vmatprep.subr.bf16.mxu0 0
        %487 = vmatpush1.bf16.xpose.msra.mxu0 0
        %488 = vmatprep.subr.bf16.mxu0 0
        %489 = vmatpush1.bf16.xpose.msra.mxu0 0
        %490 = vmatprep.subr.bf16.mxu0 0
        %491 = vmatpush1.bf16.xpose.msra.mxu0 0
        %492 = vmatprep.subr.bf16.mxu0 0
        %493 = vmatpush1.bf16.xpose.msra.mxu0 %v431
        %494 = vmatprep.subr.bf16.mxu0 0
        %495 = vmatpush1.bf16.xpose.msra.mxu0 %v428
        %496 = vmatprep.subr.bf16.mxu0 0
        %497 = vmatpush2.bf16.xpose.msra.mxu0 0
        %498 = vmatprep.subr.bf16.mxu0 0
        %499 = vmatpush2.bf16.xpose.msra.mxu0 0
        %500 = vmatprep.subr.bf16.mxu0 0
        %501 = vmatpush2.bf16.xpose.msra.mxu0 0
        %502 = vmatprep.subr.bf16.mxu0 0
        %503 = vmatpush2.bf16.xpose.msra.mxu0 0
        %504 = vmatprep.subr.bf16.mxu0 0
        %505 = vmatpush2.bf16.xpose.msra.mxu0 0
        %506 = vmatprep.subr.bf16.mxu0 0
        %507 = vmatpush2.bf16.xpose.msra.mxu0 0
        %508 = vmatprep.subr.bf16.mxu0 0
        %509 = vmatpush2.bf16.xpose.msra.mxu0 0
        %510 = vmatprep.subr.bf16.mxu0 0
        %511 = vmatpush2.bf16.xpose.msra.mxu0 0
        %512 = vmatprep.mubr.bf16.mxu0 0
        %513 = vmatmul.mubr.bf16.gmra.mxu0 %v478
        %v514 = vpop.f32.mrf.mxu0
        %v515 = vadd.f32 0.0, %v514
        %v516 = vpop.f32.mrf.mxu0
        %v517 = vpop.f32.mrf.mxu0
        %v518 = vpop.f32.mrf.mxu0
        %519 = vdwg.mxu0
        %v520 = vmax.f32 %v515, 0.0
        %521 = vst.msk [vmem:[#allocation2 + $0x8] sm:$0xff] %vm313, %v520
        %v522 = vld [vmem:[#allocation2] sm:$0xff]
        %v523 = vld [vmem:[#allocation2 + $0x8] sm:$0xff]
        %v524 = vpack.c.bf16 %v523, %v522
        %v526 = vsel %vm313, %v524, 0
        %v529 = vsel %vm313, %v420, 0
        %v532 = vsel %vm313, %v421, 0
        %534 = vmatprep.subr.bf16.mxu0 0
        %535 = vmatpush1.bf16.xpose.msra.mxu0 0
        %536 = vmatprep.subr.bf16.mxu0 0
        %537 = vmatpush1.bf16.xpose.msra.mxu0 0
        %538 = vmatprep.subr.bf16.mxu0 0
        %539 = vmatpush1.bf16.xpose.msra.mxu0 0
        %540 = vmatprep.subr.bf16.mxu0 0
        %541 = vmatpush1.bf16.xpose.msra.mxu0 0
        %542 = vmatprep.subr.bf16.mxu0 0
        %543 = vmatpush1.bf16.xpose.msra.mxu0 0
        %544 = vmatprep.subr.bf16.mxu0 0
        %545 = vmatpush1.bf16.xpose.msra.mxu0 0
        %546 = vmatprep.subr.bf16.mxu0 0
        %547 = vmatpush1.bf16.xpose.msra.mxu0 %v532
        %548 = vmatprep.subr.bf16.mxu0 0
        %549 = vmatpush1.bf16.xpose.msra.mxu0 %v529
        %550 = vmatprep.subr.bf16.mxu0 0
        %551 = vmatpush2.bf16.xpose.msra.mxu0 0
        %552 = vmatprep.subr.bf16.mxu0 0
        %553 = vmatpush2.bf16.xpose.msra.mxu0 0
        %554 = vmatprep.subr.bf16.mxu0 0
        %555 = vmatpush2.bf16.xpose.msra.mxu0 0
        %556 = vmatprep.subr.bf16.mxu0 0
        %557 = vmatpush2.bf16.xpose.msra.mxu0 0
        %558 = vmatprep.subr.bf16.mxu0 0
        %559 = vmatpush2.bf16.xpose.msra.mxu0 0
        %560 = vmatprep.subr.bf16.mxu0 0
        %561 = vmatpush2.bf16.xpose.msra.mxu0 0
        %562 = vmatprep.subr.bf16.mxu0 0
        %563 = vmatpush2.bf16.xpose.msra.mxu0 0
        %564 = vmatprep.subr.bf16.mxu0 0
        %565 = vmatpush2.bf16.xpose.msra.mxu0 0
        %566 = vmatprep.mubr.bf16.mxu0 0
        %567 = vmatmul.mubr.bf16.gmra.mxu0 %v526
        %v568 = vpop.f32.mrf.mxu0
        %v569 = vadd.f32 0.0, %v568
        %v570 = vpop.f32.mrf.mxu0
        %v571 = vpop.f32.mrf.mxu0
        %v572 = vadd.f32 0.0, %v571
        %v573 = vpop.f32.mrf.mxu0
        %574 = vdwg.mxu0
        %v575 = vmax.f32 %v569, 0.0
        %v576 = vmax.f32 %v572, 0.0
        %v578 = vsel %vm313, %v575, 0
        %v581 = vsel %vm313, %v576, 0
        %583 = vmatprep.subr.mxu0 0.0
        %584 = vmatpush1.xpose.msra.mxu0 0.0
        %585 = vmatprep.subr.mxu0 0.0
        %586 = vmatpush1.xpose.msra.mxu0 0.0
        %587 = vmatprep.subr.mxu0 0.0
        %588 = vmatpush1.xpose.msra.mxu0 0.0
        %589 = vmatprep.subr.mxu0 0.0
        %590 = vmatpush1.xpose.msra.mxu0 0.0
        %591 = vmatprep.subr.mxu0 0.0
        %592 = vmatpush1.xpose.msra.mxu0 0.0
        %593 = vmatprep.subr.mxu0 0.0
        %594 = vmatpush1.xpose.msra.mxu0 0.0
        %595 = vmatprep.subr.mxu0 0.0
        %596 = vmatpush1.xpose.msra.mxu0 0.0
        %597 = vmatprep.subr.mxu0 0.0
        %598 = vmatpush1.xpose.msra.mxu0 0.0
        %599 = vmatprep.subr.mxu0 0.0
        %600 = vmatpush1.xpose.msra.mxu0 0.0
        %601 = vmatprep.subr.mxu0 0.0
        %602 = vmatpush1.xpose.msra.mxu0 0.0
        %603 = vmatprep.subr.mxu0 0.0
        %604 = vmatpush1.xpose.msra.mxu0 0.0
        %605 = vmatprep.subr.mxu0 0.0
        %606 = vmatpush1.xpose.msra.mxu0 0.0
        %607 = vmatprep.subr.mxu0 0.0
        %608 = vmatpush1.xpose.msra.mxu0 0.0
        %609 = vmatprep.subr.mxu0 0.0
        %610 = vmatpush1.xpose.msra.mxu0 0.0
        %611 = vmatprep.subr.mxu0 0.0
        %612 = vmatpush1.xpose.msra.mxu0 %v581
        %613 = vmatprep.subr.mxu0 0.0
        %614 = vmatpush1.xpose.msra.mxu0 %v578
        %615 = vmatprep.subr.mxu0 0.0
        %616 = vmatpush2.xpose.msra.mxu0 0.0
        %617 = vmatprep.subr.mxu0 0.0
        %618 = vmatpush2.xpose.msra.mxu0 0.0
        %619 = vmatprep.subr.mxu0 0.0
        %620 = vmatpush2.xpose.msra.mxu0 0.0
        %621 = vmatprep.subr.mxu0 0.0
        %622 = vmatpush2.xpose.msra.mxu0 0.0
        %623 = vmatprep.subr.mxu0 0.0
        %624 = vmatpush2.xpose.msra.mxu0 0.0
        %625 = vmatprep.subr.mxu0 0.0
        %626 = vmatpush2.xpose.msra.mxu0 0.0
        %627 = vmatprep.subr.mxu0 0.0
        %628 = vmatpush2.xpose.msra.mxu0 0.0
        %629 = vmatprep.subr.mxu0 0.0
        %630 = vmatpush2.xpose.msra.mxu0 0.0
        %631 = vmatprep.subr.mxu0 0.0
        %632 = vmatpush2.xpose.msra.mxu0 0.0
        %633 = vmatprep.subr.mxu0 0.0
        %634 = vmatpush2.xpose.msra.mxu0 0.0
        %635 = vmatprep.subr.mxu0 0.0
        %636 = vmatpush2.xpose.msra.mxu0 0.0
        %637 = vmatprep.subr.mxu0 0.0
        %638 = vmatpush2.xpose.msra.mxu0 0.0
        %639 = vmatprep.subr.mxu0 0.0
        %640 = vmatpush2.xpose.msra.mxu0 0.0
        %641 = vmatprep.subr.mxu0 0.0
        %642 = vmatpush2.xpose.msra.mxu0 0.0
        %643 = vmatprep.subr.mxu0 0.0
        %644 = vmatpush2.xpose.msra.mxu0 0.0
        %645 = vmatprep.subr.mxu0 0.0
        %646 = vmatpush2.xpose.msra.mxu0 0.0
        %647 = vmatprep.mubr.f32.mxu0 0.0
        %648 = vmatmul.mubr.f32.gmra.mxu0 %v578
        %v649 = vpop.f32.mrf.mxu0
        %v650 = vadd.f32 0.0, %v649
        %v651 = vpop.f32.mrf.mxu0
        %652 = vmatprep.mubr.f32.mxu0 0.0
        %653 = vmatmul.mubr.f32.gmra.mxu0 %v581
        %v654 = vpop.f32.mrf.mxu0
        %v655 = vadd.f32 0.0, %v654
        %v656 = vpop.f32.mrf.mxu0
        %657 = vdwg.mxu0
        %vm658 = vcmask 130048
        %659 = vst.msk [vmem:[%s303] sm:$0xff] %vm658, %v650
        %660 = vst.msk [vmem:[%s303 + $0x8] sm:$0xff] %vm658, %v655
        %s661 = sand.u32 %s170, 1
        %s662 = scalar_lea.sflag [#allocation5], %s661
        %s663 = sand.u32 %s170, 1
        %s664 = smul.addr %s663, 16
        %s665 = scalar_lea.vmem [#allocation8], %s664
        // Predicated region
        $region53: #{tpu_custom_call.1} parent=43 // pred_check
          %p666 = pneg %p180
        $region54: #{tpu_custom_call.1} parent=43 // pred_check_branch
          %668 = sbr.rel (%p666) target = $region56
        $region55: #{tpu_custom_call.1} parent=43 // pred_region
          %s670 = ssub.s32 256, 256
          %671 = vsyncadd %s662, %s670
          %s672 = smul.addr %s26, 2
          %s673 = smul.addr %s672, 128
          %s674 = scalar_lea.hbm %s6, %s673
          %s675 = sshll.u32 %s665, 4
          %s676 = int_to_ptr.vmem [resolvable:$true] %s675
          %681 = dma.vmem_to_hbm [thread:$0]  %s676, 256, %s674, %s662, 128, 128, 8
        $region56: #{tpu_custom_call.1} parent=43 // pred_fallthru
          _
      $region44: #{tpu_custom_call.1} parent=5 // pred_fallthru
        _
      %p682 = scmp.le.s32.totalorder 2, %s21
      // Predicated region
      $region57: #{tpu_custom_call.1} parent=5 // pred_check
        %p683 = pneg %p682
      $region58: #{tpu_custom_call.1} parent=5 // pred_check_branch
        %685 = sbr.rel (%p683) target = $region60
      $region59: #{tpu_custom_call.1} parent=5 // pred_region
        %s686 = ssub.s32 %s21, 2
        // Predicated region
        $region61: #{tpu_custom_call.1} parent=59 // pred_check
          %p687 = pneg %p186
        $region62: #{tpu_custom_call.1} parent=59 // pred_check_branch
          %689 = sbr.rel (%p687) target = $region64
        $region63: #{tpu_custom_call.1} parent=59 // pred_region
          %s690 = sand.u32 %s171, 1
          %s691 = scalar_lea.sflag [#allocation5], %s690
          %s692 = sand.u32 %s171, 1
          %s693 = smul.addr %s692, 16
          %s694 = scalar_lea.vmem [#allocation8], %s693
          %695 = dma.done %s691, 256
        $region64: #{tpu_custom_call.1} parent=59 // pred_fallthru
          _
      $region60: #{tpu_custom_call.1} parent=5 // pred_fallthru
        _
    $region6: #{tpu_custom_call.1} parent=1 // loop_footer
      %s25 = sadd.s32 1, %s21
    $region7: #{tpu_custom_call.1} parent=1 // loop_footer_branch
      %20 = sbr.rel target = $region3
    $region8: #{tpu_custom_call.1} parent=1 // loop_exit
      _
    %696 = vsyncpa [#allocation4], 1
    %s697 = scalar_lea.sflag [#allocation4], 1
    %698 = vsyncpa %s697, 1
    %699 = vsyncpa [#allocation7], 1
    %s700 = scalar_lea.sflag [#allocation7], 1
    %701 = vsyncpa %s700, 1
    %702 = vsyncpa [#allocation5], 1
    %s703 = scalar_lea.sflag [#allocation5], 1
    %704 = vsyncpa %s703, 1

</llo_original>
